<compile_context>
chip_gen: v6e
topology: v6e:2x2x1
jax: 0.10.0
libtpu: 0.0.40
codegen_flags: <defaults>
</compile_context>

<pallas_src>
import functools

import jax
import jax.numpy as jnp
from jax.experimental import pallas as pl
from jax.experimental.pallas import tpu as pltpu

NEG_SLOPE = 0.01  # F.leaky_relu default negative_slope


def _leaky_relu(x):
    # max(x, slope*x) == leaky_relu(x) for slope < 1; 2 VALU ops vs 3 for
    # the cmp/mul/select form.
    return jnp.maximum(x, NEG_SLOPE * x)


def _round_up(n, m):
    return ((n + m - 1) // m) * m


def valuenet_kernel(x_ref, w1_ref, b1_ref, w2_ref, b2_ref, w3_ref, b3_ref, o_ref,
                    *, final_on_mxu):
    cdt = w1_ref.dtype
    # In-kernel cast to the compute dtype (no-op for f32): x streams from HBM
    # in its original dtype, so the bf16 path does not pay an extra HBM trip.
    x = x_ref[...].astype(cdt)

    # Layer 1: MXU matmul with f32 accumulation, bias + activation in f32.
    h1 = jnp.dot(x, w1_ref[...], preferred_element_type=jnp.float32) + b1_ref[...]
    h1 = _leaky_relu(h1)

    # Layer 2.
    h2 = jnp.dot(h1.astype(cdt), w2_ref[...],
                 preferred_element_type=jnp.float32) + b2_ref[...]
    h2 = _leaky_relu(h2)

    # Layer 3 (out_features == 1).
    if final_on_mxu:
        # Narrow MXU matmul: wastes MXU width but rides an otherwise idle unit
        # instead of loading the 2-unit XLU with a lane reduction per vreg.
        out = jnp.dot(h2.astype(cdt), w3_ref[...],
                      preferred_element_type=jnp.float32)          # (tb, 1)
    else:
        # VPU multiply + XLU lane reduction (w3 passed as a (1, hidden) row).
        out = jnp.sum(h2 * w3_ref[...].astype(jnp.float32),
                      axis=-1, keepdims=True)                      # (tb, 1)

    out = out + b3_ref[0]                                          # scalar from SMEM
    o_ref[...] = out.astype(o_ref.dtype)
    # NOTE: if true-f32 MXU fidelity is required, pass precision=HIGHEST to the
    # dots (accepting the multi-pass cost); default precision is used here.


@functools.partial(jax.jit,
                   static_argnames=("block_batch", "compute_dtype", "final_on_mxu"))
def valuenet_forward(x, w1, b1, w2, b2, w3, b3, *,
                     block_batch=2048, compute_dtype="float32", final_on_mxu=True):
    cdt = jnp.dtype(compute_dtype)
    batch, feat = x.shape
    hidden = w1.shape[1]

    # Batch tile: big enough to amortize the ~0.35 us/step grid overhead.
    # Multiple of 8 sublanes (16 for bf16's packed layout). No wrapper-side
    # padding: Pallas clips the ragged last block (OOB rows are masked on
    # store and never written to the (batch, 1) output).
    row_mult = 16 if cdt == jnp.bfloat16 else 8
    tb = _round_up(min(block_batch, batch), row_mult)
    grid = (pl.cdiv(batch, tb),)

    # Weights are tiny and resident -> cast in the wrapper. x is NOT cast here.
    w1_c = w1.astype(cdt)
    w2_c = w2.astype(cdt)
    b1_f = b1.reshape(1, hidden).astype(jnp.float32)
    b2_f = b2.reshape(1, hidden).astype(jnp.float32)
    b3_s = b3.reshape(1).astype(jnp.float32)          # scalar, lives in SMEM

    const = lambda i: (0, 0)  # resident operands: block index never changes
    if final_on_mxu:
        w3_c = w3.reshape(hidden, 1).astype(cdt)      # (hidden, 1) column for MXU
        w3_spec = pl.BlockSpec((hidden, 1), const)
    else:
        w3_c = w3.reshape(1, hidden).astype(cdt)      # (1, hidden) row for VPU/XLU
        w3_spec = pl.BlockSpec((1, hidden), const)

    out = pl.pallas_call(
        functools.partial(valuenet_kernel, final_on_mxu=final_on_mxu),
        out_shape=jax.ShapeDtypeStruct((batch, 1), jnp.float32),
        grid=grid,
        in_specs=[
            pl.BlockSpec((tb, feat), lambda i: (i, 0)),        # x: pipelined per tile
            pl.BlockSpec((feat, hidden), const),               # w1 (resident)
            pl.BlockSpec((1, hidden), const),                  # b1 (resident)
            pl.BlockSpec((hidden, hidden), const),             # w2 (resident)
            pl.BlockSpec((1, hidden), const),                  # b2 (resident)
            w3_spec,                                           # w3 (resident)
            pl.BlockSpec(memory_space=pltpu.MemorySpace.SMEM),  # b3 scalar
        ],
        out_specs=pl.BlockSpec((tb, 1), lambda i: (i, 0)),
        compiler_params=pltpu.CompilerParams(
            # v7x: batch tiles may shard over the 2 TensorCores; verify on HW
            # and switch to pltpu.CORE_PARALLEL / core_map if needed.
            dimension_semantics=("parallel",),
            # Explicit VMEM budget: safe on v5e/v6e (128 MiB) and v7x (64 MiB
            # physical), ample for tb<=4096 @ hidden=128 with double buffering.
            vmem_limit_bytes=32 * 1024 * 1024,
        ),
    )(x, w1_c, b1_f, w2_c, b2_f, w3_c, b3_s)

    return out


def init_valuenet_params(key, status_size, hidden_size=128):
    """Init mirroring the PyTorch module.

    The module explicitly calls nn.init.kaiming_uniform_(weight) with a=0
    (fan_in, leaky_relu): bound = sqrt(6 / fan_in).
    Biases keep the nn.Linear default U(-1/sqrt(fan_in), +1/sqrt(fan_in)).
    Weights are stored as (in_features, out_features) — transposed vs PyTorch.
    """
    ks = jax.random.split(key, 6)

    def kaiming_uniform(k, fan_in, fan_out):
        bound = jnp.sqrt(6.0 / fan_in)
        return jax.random.uniform(
            k, (fan_in, fan_out), jnp.float32, minval=-bound, maxval=bound)

    def bias_init(k, fan_in, fan_out):
        bound = 1.0 / jnp.sqrt(fan_in)
        return jax.random.uniform(
            k, (1, fan_out), jnp.float32, minval=-bound, maxval=bound)

    w1 = kaiming_uniform(ks[0], status_size, hidden_size)
    b1 = bias_init(ks[1], status_size, hidden_size)
    w2 = kaiming_uniform(ks[2], hidden_size, hidden_size)
    b2 = bias_init(ks[3], hidden_size, hidden_size)
    w3 = kaiming_uniform(ks[4], hidden_size, 1)
    b3 = bias_init(ks[5], hidden_size, 1)
    return w1, b1, w2, b2, w3, b3


def valuenet_reference(x, w1, b1, w2, b2, w3, b3):
    h1 = jax.nn.leaky_relu(x @ w1 + b1, NEG_SLOPE)
    h2 = jax.nn.leaky_relu(h1 @ w2 + b2, NEG_SLOPE)
    return h2 @ w3 + b3


if __name__ == "__main__":
    batch = 8
    status_size = 16
    hidden_size = 32

    key = jax.random.PRNGKey(0)
    k_x, k_p, k_x2 = jax.random.split(key, 3)

    x = jax.random.normal(k_x, (batch, status_size), jnp.float32)
    params = init_valuenet_params(k_p, status_size, hidden_size)
    ref = valuenet_reference(x, *params)

    # f32 path, final layer on the MXU (default).
    out = jax.block_until_ready(valuenet_forward(x, *params))
    assert out.shape == (batch, 1), out.shape
    assert jnp.allclose(out, ref, atol=1e-5, rtol=1e-5), (
        "Pallas f32 (MXU final layer) output mismatch vs JAX reference")

    # f32 path, final layer via VPU-mul + XLU lane reduce (benchmark alternative).
    out_xlu = jax.block_until_ready(valuenet_forward(x, *params, final_on_mxu=False))
    assert jnp.allclose(out_xlu, ref, atol=1e-5, rtol=1e-5), (
        "Pallas f32 (XLU final layer) output mismatch vs JAX reference")

    # bf16 fast path (weights/activations bf16, f32 accumulation) — loose tolerance.
    out_bf16 = jax.block_until_ready(
        valuenet_forward(x, *params, compute_dtype="bfloat16"))
    assert out_bf16.shape == (batch, 1), out_bf16.shape
    assert jnp.allclose(out_bf16, ref, atol=5e-2, rtol=5e-2), (
        "Pallas bf16 output too far from f32 reference")

    # Ragged-batch path (no wrapper-side padding): batch not divisible by tile.
    batch2 = 20
    x2 = jax.random.normal(k_x2, (batch2, status_size), jnp.float32)
    ref2 = valuenet_reference(x2, *params)
    out2 = jax.block_until_ready(valuenet_forward(x2, *params, block_batch=16))
    assert out2.shape == (batch2, 1), out2.shape
    assert jnp.allclose(out2, ref2, atol=1e-5, rtol=1e-5), (
        "Pallas ragged-batch output mismatch vs JAX reference")

    print("KERNEL_OK")
</pallas_src>

<mosaic_0001>
module attributes {stable_mosaic.version = 11 : i64} {
  func.func @valuenet_kernel(%arg0: i32, %arg1: memref<8x16xf32, #tpu.memory_space<vmem>>, %arg2: memref<16x32xf32, #tpu.memory_space<vmem>>, %arg3: memref<1x32xf32, #tpu.memory_space<vmem>>, %arg4: memref<32x32xf32, #tpu.memory_space<vmem>>, %arg5: memref<1x32xf32, #tpu.memory_space<vmem>>, %arg6: memref<32x1xf32, #tpu.memory_space<vmem>>, %arg7: memref<1xf32, #tpu.memory_space<smem>>, %arg8: memref<8x1xf32, #tpu.memory_space<vmem>>) attributes {dimension_semantics = [#tpu.dimension_semantics<parallel>], iteration_bounds = array<i64: 1>, scalar_prefetch = 0 : i64, scratch_operands = 0 : i64, tpu.core_type = #tpu.core_type<tc>, window_params = [{transform_indices = @transform_0, window_bounds = array<i64: 8, 16>}, {pipeline_mode = #tpu.pipeline_mode<synchronous>, transform_indices = @transform_1, window_bounds = array<i64: 16, 32>}, {pipeline_mode = #tpu.pipeline_mode<synchronous>, transform_indices = @transform_2, window_bounds = array<i64: 1, 32>}, {pipeline_mode = #tpu.pipeline_mode<synchronous>, transform_indices = @transform_3, window_bounds = array<i64: 32, 32>}, {pipeline_mode = #tpu.pipeline_mode<synchronous>, transform_indices = @transform_4, window_bounds = array<i64: 1, 32>}, {pipeline_mode = #tpu.pipeline_mode<synchronous>, transform_indices = @transform_5, window_bounds = array<i64: 32, 1>}, {transform_indices = @transform_6, window_bounds = array<i64: 1>}, {transform_indices = @transform_7, window_bounds = array<i64: 8, 1>}]} {
    %c0 = arith.constant 0 : index
    %c0_0 = arith.constant 0 : index
    %0 = vector.load %arg1[%c0, %c0_0] : memref<8x16xf32, #tpu.memory_space<vmem>>, vector<8x16xf32>
    %c0_1 = arith.constant 0 : index
    %c0_2 = arith.constant 0 : index
    %1 = vector.load %arg2[%c0_1, %c0_2] : memref<16x32xf32, #tpu.memory_space<vmem>>, vector<16x32xf32>
    %cst = arith.constant dense<0.000000e+00> : vector<8x32xf32>
    %2 = tpu.matmul %0, %1, %cst {dimension_numbers = #tpu.dot_dimension_numbers<[1], [0], [0], [1], [0, 0, 1, 1], [], []>} : vector<8x16xf32>, vector<16x32xf32>, vector<8x32xf32> -> vector<8x32xf32>
    %c0_3 = arith.constant 0 : index
    %c0_4 = arith.constant 0 : index
    %3 = vector.load %arg3[%c0_3, %c0_4] : memref<1x32xf32, #tpu.memory_space<vmem>>, vector<1x32xf32>
    %4 = vector.broadcast %3 : vector<1x32xf32> to vector<8x32xf32>
    %5 = arith.addf %2, %4 : vector<8x32xf32>
    %cst_5 = arith.constant 0.00999999977 : f32
    %6 = vector.broadcast %cst_5 : f32 to vector<8x32xf32>
    %7 = arith.mulf %6, %5 : vector<8x32xf32>
    %8 = arith.maximumf %5, %7 : vector<8x32xf32>
    %c0_6 = arith.constant 0 : index
    %c0_7 = arith.constant 0 : index
    %9 = vector.load %arg4[%c0_6, %c0_7] : memref<32x32xf32, #tpu.memory_space<vmem>>, vector<32x32xf32>
    %cst_8 = arith.constant dense<0.000000e+00> : vector<8x32xf32>
    %10 = tpu.matmul %8, %9, %cst_8 {dimension_numbers = #tpu.dot_dimension_numbers<[1], [0], [0], [1], [0, 0, 1, 1], [], []>} : vector<8x32xf32>, vector<32x32xf32>, vector<8x32xf32> -> vector<8x32xf32>
    %c0_9 = arith.constant 0 : index
    %c0_10 = arith.constant 0 : index
    %11 = vector.load %arg5[%c0_9, %c0_10] : memref<1x32xf32, #tpu.memory_space<vmem>>, vector<1x32xf32>
    %12 = vector.broadcast %11 : vector<1x32xf32> to vector<8x32xf32>
    %13 = arith.addf %10, %12 : vector<8x32xf32>
    %cst_11 = arith.constant 0.00999999977 : f32
    %14 = vector.broadcast %cst_11 : f32 to vector<8x32xf32>
    %15 = arith.mulf %14, %13 : vector<8x32xf32>
    %16 = arith.maximumf %13, %15 : vector<8x32xf32>
    %c0_12 = arith.constant 0 : index
    %c0_13 = arith.constant 0 : index
    %17 = vector.load %arg6[%c0_12, %c0_13] : memref<32x1xf32, #tpu.memory_space<vmem>>, vector<32x1xf32>
    %cst_14 = arith.constant dense<0.000000e+00> : vector<8x1xf32>
    %18 = tpu.matmul %16, %17, %cst_14 {dimension_numbers = #tpu.dot_dimension_numbers<[1], [0], [0], [1], [0, 0, 1, 1], [], []>} : vector<8x32xf32>, vector<32x1xf32>, vector<8x1xf32> -> vector<8x1xf32>
    %c0_15 = arith.constant 0 : index
    %19 = memref.load %arg7[%c0_15] : memref<1xf32, #tpu.memory_space<smem>>
    %20 = vector.broadcast %19 : f32 to vector<8x1xf32>
    %21 = arith.addf %18, %20 : vector<8x1xf32>
    %c0_16 = arith.constant 0 : index
    %c0_17 = arith.constant 0 : index
    %22 = vector.load %arg8[%c0_16, %c0_17] : memref<8x1xf32, #tpu.memory_space<vmem>>, vector<8x1xf32>
    tpu.vector_store %arg8[%c0_16, %c0_17], %21 {strides = array<i32>} : memref<8x1xf32, #tpu.memory_space<vmem>>, vector<8x1xf32>,
    return
  }
  func.func @transform_0(%arg0: i32) -> (i32, i32) {
    %c0_i32 = arith.constant 0 : i32
    %c0_i32_0 = arith.constant 0 : i32
    return %arg0, %c0_i32 : i32, i32
  }
  func.func @transform_1(%arg0: i32) -> (i32, i32) {
    %c0_i32 = arith.constant 0 : i32
    %c0_i32_0 = arith.constant 0 : i32
    %c0_i32_1 = arith.constant 0 : i32
    return %c0_i32, %c0_i32_0 : i32, i32
  }
  func.func @transform_2(%arg0: i32) -> (i32, i32) {
    %c0_i32 = arith.constant 0 : i32
    %c0_i32_0 = arith.constant 0 : i32
    %c0_i32_1 = arith.constant 0 : i32
    return %c0_i32, %c0_i32_0 : i32, i32
  }
  func.func @transform_3(%arg0: i32) -> (i32, i32) {
    %c0_i32 = arith.constant 0 : i32
    %c0_i32_0 = arith.constant 0 : i32
    %c0_i32_1 = arith.constant 0 : i32
    return %c0_i32, %c0_i32_0 : i32, i32
  }
  func.func @transform_4(%arg0: i32) -> (i32, i32) {
    %c0_i32 = arith.constant 0 : i32
    %c0_i32_0 = arith.constant 0 : i32
    %c0_i32_1 = arith.constant 0 : i32
    return %c0_i32, %c0_i32_0 : i32, i32
  }
  func.func @transform_5(%arg0: i32) -> (i32, i32) {
    %c0_i32 = arith.constant 0 : i32
    %c0_i32_0 = arith.constant 0 : i32
    %c0_i32_1 = arith.constant 0 : i32
    return %c0_i32, %c0_i32_0 : i32, i32
  }
  func.func @transform_6(%arg0: i32) -> i32 {
    %c0_i32 = arith.constant 0 : i32
    %c0_i32_0 = arith.constant 0 : i32
    return %c0_i32 : i32
  }
  func.func @transform_7(%arg0: i32) -> (i32, i32) {
    %c0_i32 = arith.constant 0 : i32
    %c0_i32_0 = arith.constant 0 : i32
    return %arg0, %c0_i32 : i32, i32
  }
}

</mosaic_0001>

<llo_original>
// kernel: valuenet_forward.1
$region0: #{valuenet_forward.1}
  #allocation0 [shape = 'u32[]', space=smem, size = 0x4, offset = 0x4, fixed_abs, tag = 'smem constant byte address 0x4 - core index']
  #allocation1 [shape = 'u32[144,128]{1,0:T(1,128)}', space=vmem, size = 0x12000, scoped, tag = 'internal scratch']
  #allocation2 [shape = 'f32[1]{0:T(128)S(6)}', space=smem, size = 0x200, scoped, tag = 'scoped memory for valuenet_forward.1']
  %s0 = inlined_call_operand.vmem [shape: f32[8,16], index: 0, kind: input, shape index: {}]
  %s1 = inlined_call_operand.hbm [shape: f32[16,32], index: 1, kind: input, shape index: {}]
  %s2 = inlined_call_operand.vmem [shape: f32[1,32], index: 2, kind: input, shape index: {}]
  %s3 = inlined_call_operand.vmem [shape: f32[32,32], index: 3, kind: input, shape index: {}]
  %s4 = inlined_call_operand.vmem [shape: f32[1,32], index: 4, kind: input, shape index: {}]
  %s5 = inlined_call_operand.vmem [shape: f32[32,1], index: 5, kind: input, shape index: {}]
  %s6 = inlined_call_operand.<no memory space> [shape: f32[1], index: 6, kind: input, shape index: {}]
  %s7 = inlined_call_operand.vmem [shape: f32[8,1], index: 7, kind: output, shape index: {}]
  %s8 = sld [smem:[#allocation0]]
  $region42: #{valuenet_forward.1} parent=0
    _
  %s10 = ssub.s32 1, %s8
  %s11 = scalar_select 0, %s10, %s8
  %12 = sst [smem:[#allocation2]] %s6
  $region1: #{valuenet_forward.1} parent=0
    #allocation3 [shape = 'u8[8192]{0}', space=vmem, size = 0x2000, scoped, tag = 'input window, operand 1, single buffered']
    #allocation4 [shape = 's32[1]{0}', space=sflag, size = 0x4, scoped, tag = 'scoped memory for valuenet_forward.1']
    %13 = vsyncpa [#allocation4], 0
    // Predicated region
    $region2: #{valuenet_forward.1} parent=1 // pred_check
      _
    $region3: #{valuenet_forward.1} parent=1 // pred_check_branch
      %15 = sbr.rel (0) target = $region5
    $region4: #{valuenet_forward.1} parent=1 // pred_region
      _
    $region5: #{valuenet_forward.1} parent=1 // pred_fallthru
      _
    // Predicated region
    $region6: #{valuenet_forward.1} parent=1 // pred_check
      _
    $region7: #{valuenet_forward.1} parent=1 // pred_check_branch
      %17 = sbr.rel (0) target = $region9
    $region8: #{valuenet_forward.1} parent=1 // pred_region
      %s19 = ssub.s32 256, 256
      %20 = vsyncadd [#allocation4], %s19
      %s21 = sshll.u32 [#allocation3], 4
      %s22 = int_to_ptr.vmem [resolvable:$true] %s21
      %27 = dma.hbm_to_vmem [thread:$0]  %s1, 256, %s22, [#allocation4], 128, 128, 8
    $region9: #{valuenet_forward.1} parent=1 // pred_fallthru
      _
    // Predicated region
    $region10: #{valuenet_forward.1} parent=1 // pred_check
      _
    $region11: #{valuenet_forward.1} parent=1 // pred_check_branch
      %29 = sbr.rel (0) target = $region13
    $region12: #{valuenet_forward.1} parent=1 // pred_region
      _
    $region13: #{valuenet_forward.1} parent=1 // pred_fallthru
      _
    // Predicated region
    $region14: #{valuenet_forward.1} parent=1 // pred_check
      _
    $region15: #{valuenet_forward.1} parent=1 // pred_check_branch
      %31 = sbr.rel (0) target = $region17
    $region16: #{valuenet_forward.1} parent=1 // pred_region
      _
    $region17: #{valuenet_forward.1} parent=1 // pred_fallthru
      _
    // Predicated region
    $region18: #{valuenet_forward.1} parent=1 // pred_check
      _
    $region19: #{valuenet_forward.1} parent=1 // pred_check_branch
      %33 = sbr.rel (0) target = $region21
    $region20: #{valuenet_forward.1} parent=1 // pred_region
      _
    $region21: #{valuenet_forward.1} parent=1 // pred_fallthru
      _
    // Predicated region
    $region22: #{valuenet_forward.1} parent=1 // pred_check
      _
    $region23: #{valuenet_forward.1} parent=1 // pred_check_branch
      %35 = sbr.rel (0) target = $region25
    $region24: #{valuenet_forward.1} parent=1 // pred_region
      _
    $region25: #{valuenet_forward.1} parent=1 // pred_fallthru
      _
    // Predicated region
    $region26: #{valuenet_forward.1} parent=1 // pred_check
      _
    $region27: #{valuenet_forward.1} parent=1 // pred_check_branch
      %37 = sbr.rel (0) target = $region29
    $region28: #{valuenet_forward.1} parent=1 // pred_region
      _
    $region29: #{valuenet_forward.1} parent=1 // pred_fallthru
      _
    // Predicated region
    $region30: #{valuenet_forward.1} parent=1 // pred_check
      _
    $region31: #{valuenet_forward.1} parent=1 // pred_check_branch
      %39 = sbr.rel (0) target = $region33
    $region32: #{valuenet_forward.1} parent=1 // pred_region
      %40 = dma.done [#allocation4], 256
    $region33: #{valuenet_forward.1} parent=1 // pred_fallthru
      _
    %v41 = vld [vmem:[%s0] sm:$0xff]
    %v42 = vld [vmem:[#allocation3] sm:$0xff]
    %v43 = vld [vmem:[#allocation3 + $0x8] sm:$0xff]
    %v44 = vld [vmem:[%s2] sm:$0x1]
    %v46 = vlaneseq
    %v47 = vshrl.u32 %v46, 7
    %v48 = vsub.s32 0, %v47
    %v49 = vrot.slane %v44, %v48
    %vm51 = vcmask 130048
    %v53 = vsel %vm51, %v41, 0
    %55 = vmatprep.subr.mxu0 0.0
    %56 = vmatpush1.msra.mxu0 0.0
    %57 = vmatprep.subr.mxu0 0.0
    %58 = vmatpush1.msra.mxu0 0.0
    %59 = vmatprep.subr.mxu0 0.0
    %60 = vmatpush1.msra.mxu0 0.0
    %61 = vmatprep.subr.mxu0 0.0
    %62 = vmatpush1.msra.mxu0 0.0
    %63 = vmatprep.subr.mxu0 0.0
    %64 = vmatpush1.msra.mxu0 0.0
    %65 = vmatprep.subr.mxu0 0.0
    %66 = vmatpush1.msra.mxu0 0.0
    %67 = vmatprep.subr.mxu0 0.0
    %68 = vmatpush1.msra.mxu0 0.0
    %69 = vmatprep.subr.mxu0 0.0
    %70 = vmatpush1.msra.mxu0 0.0
    %71 = vmatprep.subr.mxu0 0.0
    %72 = vmatpush1.msra.mxu0 0.0
    %73 = vmatprep.subr.mxu0 0.0
    %74 = vmatpush1.msra.mxu0 0.0
    %75 = vmatprep.subr.mxu0 0.0
    %76 = vmatpush1.msra.mxu0 0.0
    %77 = vmatprep.subr.mxu0 0.0
    %78 = vmatpush1.msra.mxu0 0.0
    %79 = vmatprep.subr.mxu0 0.0
    %80 = vmatpush1.msra.mxu0 0.0
    %81 = vmatprep.subr.mxu0 0.0
    %82 = vmatpush1.msra.mxu0 0.0
    %83 = vmatprep.subr.mxu0 0.0
    %84 = vmatpush1.msra.mxu0 %v43
    %85 = vmatprep.subr.mxu0 0.0
    %86 = vmatpush1.msra.mxu0 %v42
    %87 = vmatprep.subr.mxu0 0.0
    %88 = vmatpush2.msra.mxu0 0.0
    %89 = vmatprep.subr.mxu0 0.0
    %90 = vmatpush2.msra.mxu0 0.0
    %91 = vmatprep.subr.mxu0 0.0
    %92 = vmatpush2.msra.mxu0 0.0
    %93 = vmatprep.subr.mxu0 0.0
    %94 = vmatpush2.msra.mxu0 0.0
    %95 = vmatprep.subr.mxu0 0.0
    %96 = vmatpush2.msra.mxu0 0.0
    %97 = vmatprep.subr.mxu0 0.0
    %98 = vmatpush2.msra.mxu0 0.0
    %99 = vmatprep.subr.mxu0 0.0
    %100 = vmatpush2.msra.mxu0 0.0
    %101 = vmatprep.subr.mxu0 0.0
    %102 = vmatpush2.msra.mxu0 0.0
    %103 = vmatprep.subr.mxu0 0.0
    %104 = vmatpush2.msra.mxu0 0.0
    %105 = vmatprep.subr.mxu0 0.0
    %106 = vmatpush2.msra.mxu0 0.0
    %107 = vmatprep.subr.mxu0 0.0
    %108 = vmatpush2.msra.mxu0 0.0
    %109 = vmatprep.subr.mxu0 0.0
    %110 = vmatpush2.msra.mxu0 0.0
    %111 = vmatprep.subr.mxu0 0.0
    %112 = vmatpush2.msra.mxu0 0.0
    %113 = vmatprep.subr.mxu0 0.0
    %114 = vmatpush2.msra.mxu0 0.0
    %115 = vmatprep.subr.mxu0 0.0
    %116 = vmatpush2.msra.mxu0 0.0
    %117 = vmatprep.subr.mxu0 0.0
    %118 = vmatpush2.msra.mxu0 0.0
    %119 = vmatprep.mubr.f32.mxu0 0.0
    %120 = vmatmul.mubr.f32.gmra.mxu0 %v53
    %v121 = vpop.f32.mrf.mxu0
    %v122 = vadd.f32 %v49, %v121
    %v123 = vpop.f32.mrf.mxu0
    %124 = vdwg.mxu0
    %v125 = vmul.f32 %v122, 0.01
    %v126 = vmax.f32 %v122, %v125
    %v127 = vld [vmem:[%s3] sm:$0xff]
    %v128 = vld [vmem:[%s3 + $0x8] sm:$0xff]
    %v129 = vld [vmem:[%s3 + $0x10] sm:$0xff]
    %v130 = vld [vmem:[%s3 + $0x18] sm:$0xff]
    %v131 = vld [vmem:[%s4] sm:$0x1]
    %v133 = vlaneseq
    %v134 = vshrl.u32 %v133, 7
    %v135 = vsub.s32 0, %v134
    %v136 = vrot.slane %v131, %v135
    %vm138 = vcmask 261120
    %v140 = vsel %vm138, %v126, 0
    %142 = vmatprep.subr.mxu0 0.0
    %143 = vmatpush1.msra.mxu0 0.0
    %144 = vmatprep.subr.mxu0 0.0
    %145 = vmatpush1.msra.mxu0 0.0
    %146 = vmatprep.subr.mxu0 0.0
    %147 = vmatpush1.msra.mxu0 0.0
    %148 = vmatprep.subr.mxu0 0.0
    %149 = vmatpush1.msra.mxu0 0.0
    %150 = vmatprep.subr.mxu0 0.0
    %151 = vmatpush1.msra.mxu0 0.0
    %152 = vmatprep.subr.mxu0 0.0
    %153 = vmatpush1.msra.mxu0 0.0
    %154 = vmatprep.subr.mxu0 0.0
    %155 = vmatpush1.msra.mxu0 0.0
    %156 = vmatprep.subr.mxu0 0.0
    %157 = vmatpush1.msra.mxu0 0.0
    %158 = vmatprep.subr.mxu0 0.0
    %159 = vmatpush1.msra.mxu0 0.0
    %160 = vmatprep.subr.mxu0 0.0
    %161 = vmatpush1.msra.mxu0 0.0
    %162 = vmatprep.subr.mxu0 0.0
    %163 = vmatpush1.msra.mxu0 0.0
    %164 = vmatprep.subr.mxu0 0.0
    %165 = vmatpush1.msra.mxu0 0.0
    %166 = vmatprep.subr.mxu0 0.0
    %167 = vmatpush1.msra.mxu0 %v130
    %168 = vmatprep.subr.mxu0 0.0
    %169 = vmatpush1.msra.mxu0 %v129
    %170 = vmatprep.subr.mxu0 0.0
    %171 = vmatpush1.msra.mxu0 %v128
    %172 = vmatprep.subr.mxu0 0.0
    %173 = vmatpush1.msra.mxu0 %v127
    %174 = vmatprep.subr.mxu0 0.0
    %175 = vmatpush2.msra.mxu0 0.0
    %176 = vmatprep.subr.mxu0 0.0
    %177 = vmatpush2.msra.mxu0 0.0
    %178 = vmatprep.subr.mxu0 0.0
    %179 = vmatpush2.msra.mxu0 0.0
    %180 = vmatprep.subr.mxu0 0.0
    %181 = vmatpush2.msra.mxu0 0.0
    %182 = vmatprep.subr.mxu0 0.0
    %183 = vmatpush2.msra.mxu0 0.0
    %184 = vmatprep.subr.mxu0 0.0
    %185 = vmatpush2.msra.mxu0 0.0
    %186 = vmatprep.subr.mxu0 0.0
    %187 = vmatpush2.msra.mxu0 0.0
    %188 = vmatprep.subr.mxu0 0.0
    %189 = vmatpush2.msra.mxu0 0.0
    %190 = vmatprep.subr.mxu0 0.0
    %191 = vmatpush2.msra.mxu0 0.0
    %192 = vmatprep.subr.mxu0 0.0
    %193 = vmatpush2.msra.mxu0 0.0
    %194 = vmatprep.subr.mxu0 0.0
    %195 = vmatpush2.msra.mxu0 0.0
    %196 = vmatprep.subr.mxu0 0.0
    %197 = vmatpush2.msra.mxu0 0.0
    %198 = vmatprep.subr.mxu0 0.0
    %199 = vmatpush2.msra.mxu0 0.0
    %200 = vmatprep.subr.mxu0 0.0
    %201 = vmatpush2.msra.mxu0 0.0
    %202 = vmatprep.subr.mxu0 0.0
    %203 = vmatpush2.msra.mxu0 0.0
    %204 = vmatprep.subr.mxu0 0.0
    %205 = vmatpush2.msra.mxu0 0.0
    %206 = vmatprep.mubr.f32.mxu0 0.0
    %207 = vmatmul.mubr.f32.gmra.mxu0 %v140
    %v208 = vpop.f32.mrf.mxu0
    %v209 = vadd.f32 %v136, %v208
    %v210 = vpop.f32.mrf.mxu0
    %211 = vdwg.mxu0
    %v212 = vmul.f32 %v209, 0.01
    %v213 = vmax.f32 %v209, %v212
    %v214 = vld [vmem:[%s5] sm:$0xff]
    %v215 = vld [vmem:[%s5 + $0x8] sm:$0xff]
    %v216 = vld [vmem:[%s5 + $0x10] sm:$0xff]
    %v217 = vld [vmem:[%s5 + $0x18] sm:$0xff]
    %s218 = sld [smem:[#allocation2]]
    %v219 = vstv %s218
    %v221 = vsel %vm138, %v213, 0
    %223 = vmatprep.subr.mxu0 0.0
    %224 = vmatpush1.msra.mxu0 0.0
    %225 = vmatprep.subr.mxu0 0.0
    %226 = vmatpush1.msra.mxu0 0.0
    %227 = vmatprep.subr.mxu0 0.0
    %228 = vmatpush1.msra.mxu0 0.0
    %229 = vmatprep.subr.mxu0 0.0
    %230 = vmatpush1.msra.mxu0 0.0
    %231 = vmatprep.subr.mxu0 0.0
    %232 = vmatpush1.msra.mxu0 0.0
    %233 = vmatprep.subr.mxu0 0.0
    %234 = vmatpush1.msra.mxu0 0.0
    %235 = vmatprep.subr.mxu0 0.0
    %236 = vmatpush1.msra.mxu0 0.0
    %237 = vmatprep.subr.mxu0 0.0
    %238 = vmatpush1.msra.mxu0 0.0
    %239 = vmatprep.subr.mxu0 0.0
    %240 = vmatpush1.msra.mxu0 0.0
    %241 = vmatprep.subr.mxu0 0.0
    %242 = vmatpush1.msra.mxu0 0.0
    %243 = vmatprep.subr.mxu0 0.0
    %244 = vmatpush1.msra.mxu0 0.0
    %245 = vmatprep.subr.mxu0 0.0
    %246 = vmatpush1.msra.mxu0 0.0
    %247 = vmatprep.subr.mxu0 0.0
    %248 = vmatpush1.msra.mxu0 %v217
    %249 = vmatprep.subr.mxu0 0.0
    %250 = vmatpush1.msra.mxu0 %v216
    %251 = vmatprep.subr.mxu0 0.0
    %252 = vmatpush1.msra.mxu0 %v215
    %253 = vmatprep.subr.mxu0 0.0
    %254 = vmatpush1.msra.mxu0 %v214
    %255 = vmatprep.subr.mxu0 0.0
    %256 = vmatpush2.msra.mxu0 0.0
    %257 = vmatprep.subr.mxu0 0.0
    %258 = vmatpush2.msra.mxu0 0.0
    %259 = vmatprep.subr.mxu0 0.0
    %260 = vmatpush2.msra.mxu0 0.0
    %261 = vmatprep.subr.mxu0 0.0
    %262 = vmatpush2.msra.mxu0 0.0
    %263 = vmatprep.subr.mxu0 0.0
    %264 = vmatpush2.msra.mxu0 0.0
    %265 = vmatprep.subr.mxu0 0.0
    %266 = vmatpush2.msra.mxu0 0.0
    %267 = vmatprep.subr.mxu0 0.0
    %268 = vmatpush2.msra.mxu0 0.0
    %269 = vmatprep.subr.mxu0 0.0
    %270 = vmatpush2.msra.mxu0 0.0
    %271 = vmatprep.subr.mxu0 0.0
    %272 = vmatpush2.msra.mxu0 0.0
    %273 = vmatprep.subr.mxu0 0.0
    %274 = vmatpush2.msra.mxu0 0.0
    %275 = vmatprep.subr.mxu0 0.0
    %276 = vmatpush2.msra.mxu0 0.0
    %277 = vmatprep.subr.mxu0 0.0
    %278 = vmatpush2.msra.mxu0 0.0
    %279 = vmatprep.subr.mxu0 0.0
    %280 = vmatpush2.msra.mxu0 0.0
    %281 = vmatprep.subr.mxu0 0.0
    %282 = vmatpush2.msra.mxu0 0.0
    %283 = vmatprep.subr.mxu0 0.0
    %284 = vmatpush2.msra.mxu0 0.0
    %285 = vmatprep.subr.mxu0 0.0
    %286 = vmatpush2.msra.mxu0 0.0
    %287 = vmatprep.mubr.f32.mxu0 0.0
    %288 = vmatmul.mubr.f32.gmra.mxu0 %v221
    %v289 = vpop.f32.mrf.mxu0
    %v290 = vadd.f32 %v219, %v289
    %v291 = vpop.f32.mrf.mxu0
    %292 = vdwg.mxu0
    %vm293 = vcmask 7168
    %294 = vst.msk [vmem:[%s7] sm:$0xff] %vm293, %v290
    // Predicated region
    $region34: #{valuenet_forward.1} parent=1 // pred_check
      _
    $region35: #{valuenet_forward.1} parent=1 // pred_check_branch
      %296 = sbr.rel (0) target = $region37
    $region36: #{valuenet_forward.1} parent=1 // pred_region
      _
    $region37: #{valuenet_forward.1} parent=1 // pred_fallthru
      _
    // Predicated region
    $region38: #{valuenet_forward.1} parent=1 // pred_check
      _
    $region39: #{valuenet_forward.1} parent=1 // pred_check_branch
      %298 = sbr.rel (0) target = $region41
    $region40: #{valuenet_forward.1} parent=1 // pred_region
      _
    $region41: #{valuenet_forward.1} parent=1 // pred_fallthru
      _
    %299 = vsyncpa [#allocation4], 1

</llo_original>
